<compile_context>
chip_gen: v7x
topology: tpu7x:2x2x1
jax: 0.10.0
libtpu: 0.0.40
codegen_flags: <defaults>
</compile_context>

<pallas_src>
import jax
import jax.numpy as jnp
from jax.experimental import pallas as pl
from jax.experimental.pallas import tpu as pltpu

INPUT_DIM = 128
LATENT_DIM = 32
BATCH = 8

# ---- static packing layout (all row offsets are multiples of 16) -----------
# w256 slab bf16 [256, 256]: rows = [w1 (128) | d3 (128)]
# w128 slab bf16 [928, 128]: rows =
#     [w2 (256) @0 | d2 K-pad 64->128 (128) @256 | d4 (256) @384 |
#      w3 out-pad 64->128 (128) @640 | heads K&out-pad (128) @768 |
#      d1 out-pad 64->128 (32) @896]
# bias slab f32 [8, 256], one zero-padded row per layer in order:
#     0:b1(256) 1:b2(128) 2:b3(64) 3:bm|bv(64) 4:c1(64) 5:c2(128) 6:c3(256) 7:c4(128)
W2_OFF, D2_OFF, D4_OFF, W3_OFF, WH_OFF, D1_OFF = 0, 256, 384, 640, 768, 896


def _vae_kernel(act_ref, w256_ref, w128_ref, bias_ref, out_ref):
    """Fused MLP-VAE forward.  Everything resident in VMEM (~370 KiB)."""
    f32 = jnp.float32
    bf16 = jnp.bfloat16
    b = act_ref.shape[0] // 2           # static batch

    def lin(h, w_slab_ref, row0, rows, bias_row, out):
        w = w_slab_ref[row0:row0 + rows, :]               # bf16 [rows, out] view
        bias = bias_ref[bias_row:bias_row + 1, :out]      # f32  [1, out]
        return jnp.dot(h.astype(bf16), w, preferred_element_type=f32) + bias

    x = act_ref[:b, :].astype(f32)                         # [B, 128]
    eps = act_ref[b:, :LATENT_DIM].astype(f32)             # [B, 32]

    # --- encoder ---
    h = jnp.maximum(lin(x, w256_ref, 0, 128, 0, 256), 0.0)        # 128 -> 256
    h = jnp.maximum(lin(h, w128_ref, W2_OFF, 256, 1, 128), 0.0)   # 256 -> 128
    h = jnp.maximum(lin(h, w128_ref, W3_OFF, 128, 2, 128), 0.0)   # 128 -> 64 (lanes 64.. = 0)

    # --- fused mu|logvar head (K zero-padded 64->128, out zero-padded to 128) ---
    mulv = lin(h, w128_ref, WH_OFF, 128, 3, 128)                  # [B, 128]; lanes 64.. = 0
    mu = mulv[:, :LATENT_DIM]
    logvar = mulv[:, LATENT_DIM:2 * LATENT_DIM]

    # --- reparameterize: z = mu + eps * exp(0.5 * logvar) (f32, register-level) ---
    z = mu + eps * jnp.exp(0.5 * logvar)                          # [B, 32]

    # --- decoder ---
    g = jnp.maximum(lin(z, w128_ref, D1_OFF, 32, 4, 128), 0.0)    # 32  -> 64 (lanes 64.. = 0)
    g = jnp.maximum(lin(g, w128_ref, D2_OFF, 128, 5, 128), 0.0)   # 64  -> 128 (K zero-padded)
    g = jnp.maximum(lin(g, w256_ref, 128, 128, 6, 256), 0.0)      # 128 -> 256
    recon = lin(g, w128_ref, D4_OFF, 256, 7, 128)                 # 256 -> 128

    # single lane-dense output: rows 0:B = recon, rows B:2B = packed mu|logvar
    out_ref[:b, :] = recon.astype(out_ref.dtype)
    out_ref[b:, :] = mulv.astype(out_ref.dtype)


def init_params(key, input_dim, latent_dim):
    """PyTorch-Linear-like init: U(-1/sqrt(fan_in), 1/sqrt(fan_in)).

    Returns flat f32 list: w1,b1,w2,b2,w3,b3,wm,bm,wv,bv,d1,c1,d2,c2,d3,c3,d4,c4
    with weights stored [in_features, out_features]."""
    dims = [(input_dim, 256), (256, 128), (128, 64),               # encoder
            (64, latent_dim), (64, latent_dim),                    # mu / logvar heads
            (latent_dim, 64), (64, 128), (128, 256), (256, input_dim)]  # decoder
    params = []
    keys = jax.random.split(key, 2 * len(dims))
    for i, (fan_in, fan_out) in enumerate(dims):
        bound = 1.0 / (fan_in ** 0.5)
        w = jax.random.uniform(keys[2 * i], (fan_in, fan_out),
                               jnp.float32, -bound, bound)
        b = jax.random.uniform(keys[2 * i + 1], (1, fan_out),
                               jnp.float32, -bound, bound)
        params += [w, b]
    return params


def pack_params(params):
    """Pack 18 per-layer tensors into 2 bf16 weight slabs + 1 f32 bias slab.

    Padded rows/columns are explicitly zero-filled so they contribute exactly
    0 to every accumulation."""
    (w1, b1, w2, b2, w3, b3, wm, bm, wv, bv,
     d1, c1, d2, c2, d3, c3, d4, c4) = params
    bf16 = jnp.bfloat16

    def pad_out(w, out=128):            # zero-pad output (lane) dim
        return jnp.pad(w, ((0, 0), (0, out - w.shape[1])))

    def pad_in(w, rows=128):            # zero-pad input (K / row) dim
        return jnp.pad(w, ((0, rows - w.shape[0]), (0, 0)))

    # fuse the mu / logvar heads
    w_heads = jnp.concatenate([wm, wv], axis=1)                    # [64, 2*latent]
    b_heads = jnp.concatenate([bm, bv], axis=1)                    # [1, 2*latent]

    w256 = jnp.concatenate([w1, d3], axis=0).astype(bf16)          # [256, 256]

    w128 = jnp.concatenate([
        w2,                              # rows   0..256
        pad_in(d2, 128),                 # rows 256..384  (K 64->128, zero rows)
        d4,                              # rows 384..640
        pad_out(w3),                     # rows 640..768  (out 64->128, zero cols)
        pad_in(pad_out(w_heads), 128),   # rows 768..896  (K & out padded)
        pad_out(d1),                     # rows 896..928  (out 64->128, zero cols)
    ], axis=0).astype(bf16)                                         # [928, 128]

    def pad_row(b):
        return jnp.pad(b, ((0, 0), (0, 256 - b.shape[1])))
    bias = jnp.concatenate(
        [pad_row(b) for b in (b1, b2, b3, b_heads, c1, c2, c3, c4)], axis=0)  # [8, 256]

    return w256, w128, bias


def vae_forward(x, eps, packed):
    """Single fused pallas_call; returns (recon, mu, logvar)."""
    # TODO(synk): if the same weights are reused across many calls, keep them
    # resident via a cross-call prefetch (P10) instead of re-DMAing ~360 KiB.
    w256, w128, bias = packed
    batch, input_dim = x.shape
    latent = eps.shape[1]

    # one activation input: rows 0:B = x, rows B:2B = eps zero-padded to 128 lanes
    eps_pad = jnp.pad(eps, ((0, 0), (0, input_dim - latent)))
    act = jnp.concatenate([x, eps_pad], axis=0)                    # [2B, 128] f32

    vmem = pl.BlockSpec(memory_space=pltpu.MemorySpace.VMEM)
    out = pl.pallas_call(
        _vae_kernel,
        out_shape=jax.ShapeDtypeStruct((2 * batch, input_dim), jnp.float32),
        in_specs=[vmem] * 4,
        out_specs=vmem,
    )(act, w256, w128, bias)

    recon = out[:batch]
    mu = out[batch:, :latent]
    logvar = out[batch:, latent:2 * latent]
    return recon, mu, logvar


def vae_forward_ref(x, eps, params):
    """Pure-JAX reference mirroring the kernel math (bf16 weights/activations,
    f32 accumulation) for correctness check."""
    (w1, b1, w2, b2, w3, b3, wm, bm, wv, bv,
     d1, c1, d2, c2, d3, c3, d4, c4) = params
    bf16 = jnp.bfloat16

    def lin(h, w, b):
        return jnp.dot(h.astype(bf16), w.astype(bf16),
                       preferred_element_type=jnp.float32) + b

    h = jnp.maximum(lin(x, w1, b1), 0.0)
    h = jnp.maximum(lin(h, w2, b2), 0.0)
    h = jnp.maximum(lin(h, w3, b3), 0.0)
    mu = lin(h, wm, bm)
    logvar = lin(h, wv, bv)
    z = mu + eps * jnp.exp(0.5 * logvar)
    g = jnp.maximum(lin(z, d1, c1), 0.0)
    g = jnp.maximum(lin(g, d2, c2), 0.0)
    g = jnp.maximum(lin(g, d3, c3), 0.0)
    recon = lin(g, d4, c4)
    return recon, mu, logvar


if __name__ == "__main__":
    key = jax.random.PRNGKey(0)
    k_x, k_eps, k_p = jax.random.split(key, 3)

    x = jax.random.normal(k_x, (BATCH, INPUT_DIM), jnp.float32)
    # TODO(synk): eps uses jax.random (not torch.randn_like's RNG stream); the
    # reparameterization math is identical.
    eps = jax.random.normal(k_eps, (BATCH, LATENT_DIM), jnp.float32)

    params = init_params(k_p, INPUT_DIM, LATENT_DIM)
    packed = pack_params(params)

    recon, mu, logvar = jax.block_until_ready(vae_forward(x, eps, packed))

    # sanity check against pure-JAX reference (same bf16 math)
    r_ref, mu_ref, lv_ref = vae_forward_ref(x, eps, params)
    assert recon.shape == (BATCH, INPUT_DIM)
    assert mu.shape == (BATCH, LATENT_DIM) and logvar.shape == (BATCH, LATENT_DIM)
    assert jnp.allclose(recon, r_ref, atol=2e-2, rtol=2e-2)
    assert jnp.allclose(mu, mu_ref, atol=2e-2, rtol=2e-2)
    assert jnp.allclose(logvar, lv_ref, atol=2e-2, rtol=2e-2)

    print("KERNEL_OK")
</pallas_src>

<mosaic_0001>
module attributes {stable_mosaic.version = 11 : i64} {
  func.func @_vae_kernel(%arg0: memref<16x128xf32, #tpu.memory_space<vmem>>, %arg1: memref<256x256xbf16, #tpu.memory_space<vmem>>, %arg2: memref<928x128xbf16, #tpu.memory_space<vmem>>, %arg3: memref<8x256xf32, #tpu.memory_space<vmem>>, %arg4: memref<16x128xf32, #tpu.memory_space<vmem>>) attributes {dimension_semantics = [], scalar_prefetch = 0 : i64, scratch_operands = 0 : i64, tpu.core_type = #tpu.core_type<tc>} {
    %c0 = arith.constant 0 : index
    %c0_0 = arith.constant 0 : index
    %0 = vector.load %arg0[%c0, %c0_0] : memref<16x128xf32, #tpu.memory_space<vmem>>, vector<8x128xf32>
    %c8 = arith.constant 8 : index
    %c0_1 = arith.constant 0 : index
    %1 = vector.load %arg0[%c8, %c0_1] : memref<16x128xf32, #tpu.memory_space<vmem>>, vector<8x32xf32>
    %c0_2 = arith.constant 0 : index
    %c0_3 = arith.constant 0 : index
    %2 = vector.load %arg1[%c0_2, %c0_3] : memref<256x256xbf16, #tpu.memory_space<vmem>>, vector<128x256xbf16>
    %c0_4 = arith.constant 0 : index
    %c0_5 = arith.constant 0 : index
    %3 = vector.load %arg3[%c0_4, %c0_5] : memref<8x256xf32, #tpu.memory_space<vmem>>, vector<1x256xf32>
    %4 = arith.truncf %0 : vector<8x128xf32> to vector<8x128xbf16>
    %cst = arith.constant dense<0.000000e+00> : vector<8x256xf32>
    %5 = tpu.matmul %4, %2, %cst {dimension_numbers = #tpu.dot_dimension_numbers<[1], [0], [0], [1], [0, 0, 1, 1], [], []>} : vector<8x128xbf16>, vector<128x256xbf16>, vector<8x256xf32> -> vector<8x256xf32>
    %6 = vector.broadcast %3 : vector<1x256xf32> to vector<8x256xf32>
    %7 = arith.addf %5, %6 : vector<8x256xf32>
    %cst_6 = arith.constant 0.000000e+00 : f32
    %8 = vector.broadcast %cst_6 : f32 to vector<8x256xf32>
    %9 = arith.maximumf %7, %8 : vector<8x256xf32>
    %c0_7 = arith.constant 0 : index
    %c0_8 = arith.constant 0 : index
    %10 = vector.load %arg2[%c0_7, %c0_8] : memref<928x128xbf16, #tpu.memory_space<vmem>>, vector<256x128xbf16>
    %c1 = arith.constant 1 : index
    %c0_9 = arith.constant 0 : index
    %11 = vector.load %arg3[%c1, %c0_9] : memref<8x256xf32, #tpu.memory_space<vmem>>, vector<1x128xf32>
    %12 = arith.truncf %9 : vector<8x256xf32> to vector<8x256xbf16>
    %cst_10 = arith.constant dense<0.000000e+00> : vector<8x128xf32>
    %13 = tpu.matmul %12, %10, %cst_10 {dimension_numbers = #tpu.dot_dimension_numbers<[1], [0], [0], [1], [0, 0, 1, 1], [], []>} : vector<8x256xbf16>, vector<256x128xbf16>, vector<8x128xf32> -> vector<8x128xf32>
    %14 = vector.broadcast %11 : vector<1x128xf32> to vector<8x128xf32>
    %15 = arith.addf %13, %14 : vector<8x128xf32>
    %cst_11 = arith.constant 0.000000e+00 : f32
    %16 = vector.broadcast %cst_11 : f32 to vector<8x128xf32>
    %17 = arith.maximumf %15, %16 : vector<8x128xf32>
    %c640 = arith.constant 640 : index
    %c0_12 = arith.constant 0 : index
    %18 = vector.load %arg2[%c640, %c0_12] : memref<928x128xbf16, #tpu.memory_space<vmem>>, vector<128x128xbf16>
    %c2 = arith.constant 2 : index
    %c0_13 = arith.constant 0 : index
    %19 = vector.load %arg3[%c2, %c0_13] : memref<8x256xf32, #tpu.memory_space<vmem>>, vector<1x128xf32>
    %20 = arith.truncf %17 : vector<8x128xf32> to vector<8x128xbf16>
    %cst_14 = arith.constant dense<0.000000e+00> : vector<8x128xf32>
    %21 = tpu.matmul %20, %18, %cst_14 {dimension_numbers = #tpu.dot_dimension_numbers<[1], [0], [0], [1], [0, 0, 1, 1], [], []>} : vector<8x128xbf16>, vector<128x128xbf16>, vector<8x128xf32> -> vector<8x128xf32>
    %22 = vector.broadcast %19 : vector<1x128xf32> to vector<8x128xf32>
    %23 = arith.addf %21, %22 : vector<8x128xf32>
    %cst_15 = arith.constant 0.000000e+00 : f32
    %24 = vector.broadcast %cst_15 : f32 to vector<8x128xf32>
    %25 = arith.maximumf %23, %24 : vector<8x128xf32>
    %c768 = arith.constant 768 : index
    %c0_16 = arith.constant 0 : index
    %26 = vector.load %arg2[%c768, %c0_16] : memref<928x128xbf16, #tpu.memory_space<vmem>>, vector<128x128xbf16>
    %c3 = arith.constant 3 : index
    %c0_17 = arith.constant 0 : index
    %27 = vector.load %arg3[%c3, %c0_17] : memref<8x256xf32, #tpu.memory_space<vmem>>, vector<1x128xf32>
    %28 = arith.truncf %25 : vector<8x128xf32> to vector<8x128xbf16>
    %cst_18 = arith.constant dense<0.000000e+00> : vector<8x128xf32>
    %29 = tpu.matmul %28, %26, %cst_18 {dimension_numbers = #tpu.dot_dimension_numbers<[1], [0], [0], [1], [0, 0, 1, 1], [], []>} : vector<8x128xbf16>, vector<128x128xbf16>, vector<8x128xf32> -> vector<8x128xf32>
    %30 = vector.broadcast %27 : vector<1x128xf32> to vector<8x128xf32>
    %31 = arith.addf %29, %30 : vector<8x128xf32>
    %32 = vector.extract_strided_slice %31 {offsets = [0, 0], sizes = [8, 32], strides = [1, 1]} : vector<8x128xf32> to vector<8x32xf32>
    %33 = vector.extract_strided_slice %31 {offsets = [0, 32], sizes = [8, 32], strides = [1, 1]} : vector<8x128xf32> to vector<8x32xf32>
    %cst_19 = arith.constant 5.000000e-01 : f32
    %34 = vector.broadcast %cst_19 : f32 to vector<8x32xf32>
    %35 = arith.mulf %34, %33 : vector<8x32xf32>
    %36 = math.exp %35 : vector<8x32xf32>
    %37 = arith.mulf %1, %36 : vector<8x32xf32>
    %38 = arith.addf %32, %37 : vector<8x32xf32>
    %c896 = arith.constant 896 : index
    %c0_20 = arith.constant 0 : index
    %39 = vector.load %arg2[%c896, %c0_20] : memref<928x128xbf16, #tpu.memory_space<vmem>>, vector<32x128xbf16>
    %c4 = arith.constant 4 : index
    %c0_21 = arith.constant 0 : index
    %40 = vector.load %arg3[%c4, %c0_21] : memref<8x256xf32, #tpu.memory_space<vmem>>, vector<1x128xf32>
    %41 = arith.truncf %38 : vector<8x32xf32> to vector<8x32xbf16>
    %cst_22 = arith.constant dense<0.000000e+00> : vector<8x128xf32>
    %42 = tpu.matmul %41, %39, %cst_22 {dimension_numbers = #tpu.dot_dimension_numbers<[1], [0], [0], [1], [0, 0, 1, 1], [], []>} : vector<8x32xbf16>, vector<32x128xbf16>, vector<8x128xf32> -> vector<8x128xf32>
    %43 = vector.broadcast %40 : vector<1x128xf32> to vector<8x128xf32>
    %44 = arith.addf %42, %43 : vector<8x128xf32>
    %cst_23 = arith.constant 0.000000e+00 : f32
    %45 = vector.broadcast %cst_23 : f32 to vector<8x128xf32>
    %46 = arith.maximumf %44, %45 : vector<8x128xf32>
    %c256 = arith.constant 256 : index
    %c0_24 = arith.constant 0 : index
    %47 = vector.load %arg2[%c256, %c0_24] : memref<928x128xbf16, #tpu.memory_space<vmem>>, vector<128x128xbf16>
    %c5 = arith.constant 5 : index
    %c0_25 = arith.constant 0 : index
    %48 = vector.load %arg3[%c5, %c0_25] : memref<8x256xf32, #tpu.memory_space<vmem>>, vector<1x128xf32>
    %49 = arith.truncf %46 : vector<8x128xf32> to vector<8x128xbf16>
    %cst_26 = arith.constant dense<0.000000e+00> : vector<8x128xf32>
    %50 = tpu.matmul %49, %47, %cst_26 {dimension_numbers = #tpu.dot_dimension_numbers<[1], [0], [0], [1], [0, 0, 1, 1], [], []>} : vector<8x128xbf16>, vector<128x128xbf16>, vector<8x128xf32> -> vector<8x128xf32>
    %51 = vector.broadcast %48 : vector<1x128xf32> to vector<8x128xf32>
    %52 = arith.addf %50, %51 : vector<8x128xf32>
    %cst_27 = arith.constant 0.000000e+00 : f32
    %53 = vector.broadcast %cst_27 : f32 to vector<8x128xf32>
    %54 = arith.maximumf %52, %53 : vector<8x128xf32>
    %c128 = arith.constant 128 : index
    %c0_28 = arith.constant 0 : index
    %55 = vector.load %arg1[%c128, %c0_28] : memref<256x256xbf16, #tpu.memory_space<vmem>>, vector<128x256xbf16>
    %c6 = arith.constant 6 : index
    %c0_29 = arith.constant 0 : index
    %56 = vector.load %arg3[%c6, %c0_29] : memref<8x256xf32, #tpu.memory_space<vmem>>, vector<1x256xf32>
    %57 = arith.truncf %54 : vector<8x128xf32> to vector<8x128xbf16>
    %cst_30 = arith.constant dense<0.000000e+00> : vector<8x256xf32>
    %58 = tpu.matmul %57, %55, %cst_30 {dimension_numbers = #tpu.dot_dimension_numbers<[1], [0], [0], [1], [0, 0, 1, 1], [], []>} : vector<8x128xbf16>, vector<128x256xbf16>, vector<8x256xf32> -> vector<8x256xf32>
    %59 = vector.broadcast %56 : vector<1x256xf32> to vector<8x256xf32>
    %60 = arith.addf %58, %59 : vector<8x256xf32>
    %cst_31 = arith.constant 0.000000e+00 : f32
    %61 = vector.broadcast %cst_31 : f32 to vector<8x256xf32>
    %62 = arith.maximumf %60, %61 : vector<8x256xf32>
    %c384 = arith.constant 384 : index
    %c0_32 = arith.constant 0 : index
    %63 = vector.load %arg2[%c384, %c0_32] : memref<928x128xbf16, #tpu.memory_space<vmem>>, vector<256x128xbf16>
    %c7 = arith.constant 7 : index
    %c0_33 = arith.constant 0 : index
    %64 = vector.load %arg3[%c7, %c0_33] : memref<8x256xf32, #tpu.memory_space<vmem>>, vector<1x128xf32>
    %65 = arith.truncf %62 : vector<8x256xf32> to vector<8x256xbf16>
    %cst_34 = arith.constant dense<0.000000e+00> : vector<8x128xf32>
    %66 = tpu.matmul %65, %63, %cst_34 {dimension_numbers = #tpu.dot_dimension_numbers<[1], [0], [0], [1], [0, 0, 1, 1], [], []>} : vector<8x256xbf16>, vector<256x128xbf16>, vector<8x128xf32> -> vector<8x128xf32>
    %67 = vector.broadcast %64 : vector<1x128xf32> to vector<8x128xf32>
    %68 = arith.addf %66, %67 : vector<8x128xf32>
    %c0_35 = arith.constant 0 : index
    %c0_36 = arith.constant 0 : index
    %69 = vector.load %arg4[%c0_35, %c0_36] : memref<16x128xf32, #tpu.memory_space<vmem>>, vector<8x128xf32>
    tpu.vector_store %arg4[%c0_35, %c0_36], %68 {strides = array<i32>} : memref<16x128xf32, #tpu.memory_space<vmem>>, vector<8x128xf32>,
    %c8_37 = arith.constant 8 : index
    %c0_38 = arith.constant 0 : index
    %70 = vector.load %arg4[%c8_37, %c0_38] : memref<16x128xf32, #tpu.memory_space<vmem>>, vector<8x128xf32>
    tpu.vector_store %arg4[%c8_37, %c0_38], %31 {strides = array<i32>} : memref<16x128xf32, #tpu.memory_space<vmem>>, vector<8x128xf32>,
    return
  }
}

</mosaic_0001>

<llo_original>
// kernel: tpu_custom_call.1
$region0: #{tpu_custom_call.1}
  #allocation0 [shape = 'u32[]', space=smem, size = 0x4, offset = 0x4, fixed_abs, tag = 'smem constant byte address 0x4 - core index']
  #allocation1 [shape = 'u32[144,128]{1,0:T(1,128)}', space=vmem, size = 0x12000, scoped, tag = 'internal scratch']
  %s0 = inlined_call_operand.hbm [shape: f32[16,128], index: 0, kind: input, shape index: {}]
  %s1 = inlined_call_operand.hbm [shape: bf16[256,256], index: 1, kind: input, shape index: {}]
  %s2 = inlined_call_operand.hbm [shape: bf16[928,128], index: 2, kind: input, shape index: {}]
  %s3 = inlined_call_operand.hbm [shape: f32[8,256], index: 3, kind: input, shape index: {}]
  %s4 = inlined_call_operand.hbm [shape: f32[16,128], index: 4, kind: output, shape index: {}]
  %s5 = sld [smem:[#allocation0]]
  $region42: #{tpu_custom_call.1} parent=0
    _
  %s7 = ssub.s32 1, %s5
  %s8 = scalar_select 0, %s7, %s5
  $region1: #{tpu_custom_call.1} parent=0
    #allocation2 [shape = 'u8[8192]{0}', space=vmem, size = 0x2000, scoped, tag = 'input window, operand 0, single buffered']
    #allocation3 [shape = 's32[1]{0}', space=sflag, size = 0x4, scoped, tag = 'scoped memory for tpu_custom_call.1']
    #allocation4 [shape = 's32[1]{0}', space=sflag, size = 0x4, scoped, tag = 'scoped memory for tpu_custom_call.1']
    #allocation5 [shape = 'u8[131072]{0}', space=vmem, size = 0x20000, scoped, tag = 'input window, operand 1, single buffered']
    #allocation6 [shape = 's32[1]{0}', space=sflag, size = 0x4, scoped, tag = 'scoped memory for tpu_custom_call.1']
    #allocation7 [shape = 'u8[237568]{0}', space=vmem, size = 0x3a000, scoped, tag = 'input window, operand 2, single buffered']
    #allocation8 [shape = 'u8[8192]{0}', space=vmem, size = 0x2000, scoped, tag = 'input window, operand 3, single buffered']
    #allocation9 [shape = 's32[1]{0}', space=sflag, size = 0x4, scoped, tag = 'scoped memory for tpu_custom_call.1']
    #allocation10 [shape = 'u8[8192]{0}', space=vmem, size = 0x2000, scoped, tag = 'output window, operand 0, single buffered']
    %9 = vsyncpa [#allocation3], 0
    %10 = vsyncpa [#allocation6], 0
    %11 = vsyncpa [#allocation9], 0
    %12 = vsyncpa [#allocation4], 0
    // Predicated region
    $region2: #{tpu_custom_call.1} parent=1 // pred_check
      _
    $region3: #{tpu_custom_call.1} parent=1 // pred_check_branch
      %14 = sbr.rel (0) target = $region5
    $region4: #{tpu_custom_call.1} parent=1 // pred_region
      %s16 = ssub.s32 256, 256
      %17 = vsyncadd [#allocation3], %s16
      %s18 = sshll.u32 [#allocation2], 4
      %s19 = int_to_ptr.vmem [resolvable:$true] %s18
      %24 = dma.hbm_to_vmem [thread:$0]  %s0, 256, %s19, [#allocation3], 128, 128, 8
    $region5: #{tpu_custom_call.1} parent=1 // pred_fallthru
      _
    // Predicated region
    $region6: #{tpu_custom_call.1} parent=1 // pred_check
      _
    $region7: #{tpu_custom_call.1} parent=1 // pred_check_branch
      %26 = sbr.rel (0) target = $region9
    $region8: #{tpu_custom_call.1} parent=1 // pred_region
      %s28 = ssub.s32 4096, 4096
      %29 = vsyncadd [#allocation6], %s28
      %s30 = sshll.u32 [#allocation5], 4
      %s31 = int_to_ptr.vmem [resolvable:$true] %s30
      %36 = dma.hbm_to_vmem [thread:$0]  %s1, 4096, %s31, [#allocation6], 128, 128, 8
    $region9: #{tpu_custom_call.1} parent=1 // pred_fallthru
      _
    // Predicated region
    $region10: #{tpu_custom_call.1} parent=1 // pred_check
      _
    $region11: #{tpu_custom_call.1} parent=1 // pred_check_branch
      %38 = sbr.rel (0) target = $region13
    $region12: #{tpu_custom_call.1} parent=1 // pred_region
      %s40 = ssub.s32 7424, 7424
      %41 = vsyncadd [#allocation6], %s40
      %s42 = sshll.u32 [#allocation7], 4
      %s43 = int_to_ptr.vmem [resolvable:$true] %s42
      %48 = dma.hbm_to_vmem [thread:$0]  %s2, 7424, %s43, [#allocation6], 64, 64, 4
    $region13: #{tpu_custom_call.1} parent=1 // pred_fallthru
      _
    // Predicated region
    $region14: #{tpu_custom_call.1} parent=1 // pred_check
      _
    $region15: #{tpu_custom_call.1} parent=1 // pred_check_branch
      %50 = sbr.rel (0) target = $region17
    $region16: #{tpu_custom_call.1} parent=1 // pred_region
      %s52 = ssub.s32 256, 256
      %53 = vsyncadd [#allocation9], %s52
      %s55 = sshll.u32 [#allocation8], 4
      %s56 = int_to_ptr.vmem [resolvable:$true] %s55
      %58 = dma.hbm_to_vmem [thread:$0]  %s3, 256, %s56, [#allocation9]
    $region17: #{tpu_custom_call.1} parent=1 // pred_fallthru
      _
    // Predicated region
    $region18: #{tpu_custom_call.1} parent=1 // pred_check
      _
    $region19: #{tpu_custom_call.1} parent=1 // pred_check_branch
      %60 = sbr.rel (0) target = $region21
    $region20: #{tpu_custom_call.1} parent=1 // pred_region
      %61 = dma.done [#allocation3], 256
    $region21: #{tpu_custom_call.1} parent=1 // pred_fallthru
      _
    // Predicated region
    $region22: #{tpu_custom_call.1} parent=1 // pred_check
      _
    $region23: #{tpu_custom_call.1} parent=1 // pred_check_branch
      %63 = sbr.rel (0) target = $region25
    $region24: #{tpu_custom_call.1} parent=1 // pred_region
      %64 = dma.done [#allocation6], 4096
    $region25: #{tpu_custom_call.1} parent=1 // pred_fallthru
      _
    // Predicated region
    $region26: #{tpu_custom_call.1} parent=1 // pred_check
      _
    $region27: #{tpu_custom_call.1} parent=1 // pred_check_branch
      %66 = sbr.rel (0) target = $region29
    $region28: #{tpu_custom_call.1} parent=1 // pred_region
      %67 = dma.done [#allocation6], 7424
    $region29: #{tpu_custom_call.1} parent=1 // pred_fallthru
      _
    // Predicated region
    $region30: #{tpu_custom_call.1} parent=1 // pred_check
      _
    $region31: #{tpu_custom_call.1} parent=1 // pred_check_branch
      %69 = sbr.rel (0) target = $region33
    $region32: #{tpu_custom_call.1} parent=1 // pred_region
      %70 = dma.done [#allocation9], 256
    $region33: #{tpu_custom_call.1} parent=1 // pred_fallthru
      _
    %v72 = vld [vmem:[#allocation2] sm:$0xff]
    %v73 = vld [vmem:[#allocation2 + $0x8] sm:$0xff]
    %v74 = vld [vmem:[#allocation5] sm:$0xff]
    %v75 = vld [vmem:[#allocation5 + $0x8] sm:$0xff]
    %v76 = vld [vmem:[#allocation5 + $0x10] sm:$0xff]
    %v77 = vld [vmem:[#allocation5 + $0x18] sm:$0xff]
    %v78 = vld [vmem:[#allocation5 + $0x20] sm:$0xff]
    %v79 = vld [vmem:[#allocation5 + $0x28] sm:$0xff]
    %v80 = vld [vmem:[#allocation5 + $0x30] sm:$0xff]
    %v81 = vld [vmem:[#allocation5 + $0x38] sm:$0xff]
    %v82 = vld [vmem:[#allocation5 + $0x40] sm:$0xff]
    %v83 = vld [vmem:[#allocation5 + $0x48] sm:$0xff]
    %v84 = vld [vmem:[#allocation5 + $0x50] sm:$0xff]
    %v85 = vld [vmem:[#allocation5 + $0x58] sm:$0xff]
    %v86 = vld [vmem:[#allocation5 + $0x60] sm:$0xff]
    %v87 = vld [vmem:[#allocation5 + $0x68] sm:$0xff]
    %v88 = vld [vmem:[#allocation5 + $0x70] sm:$0xff]
    %v89 = vld [vmem:[#allocation5 + $0x78] sm:$0xff]
    %v90 = vld [vmem:[#allocation8] ss:$8 sm:$0x3]
    %v91 = vpack.c.bf16 %v72, %v72
    %v93 = vlaneseq
    %v94 = vshrl.u32 %v93, 7
    %v95 = vsub.s32 0, %v94
    %v96 = vrot.slane %v90, %v95
    %v97 = vlaneseq
    %v98 = vshrl.u32 %v97, 7
    %v99 = vsub.s32 1, %v98
    %v100 = vrot.slane %v90, %v99
    %v119 = vunpack.c.l.b16 %v74
    %v120 = vunpack.c.h.b16 %v74
    %v121 = vunpack.c.l.b16 %v75
    %v122 = vunpack.c.h.b16 %v75
    %v123 = vunpack.c.l.b16 %v76
    %v124 = vunpack.c.h.b16 %v76
    %v125 = vunpack.c.l.b16 %v77
    %v126 = vunpack.c.h.b16 %v77
    %v127 = vunpack.c.l.b16 %v78
    %v128 = vunpack.c.h.b16 %v78
    %v129 = vunpack.c.l.b16 %v79
    %v130 = vunpack.c.h.b16 %v79
    %v131 = vunpack.c.l.b16 %v80
    %v132 = vunpack.c.h.b16 %v80
    %v133 = vunpack.c.l.b16 %v81
    %v134 = vunpack.c.h.b16 %v81
    %v135 = vunpack.c.l.b16 %v82
    %v136 = vunpack.c.h.b16 %v82
    %v137 = vunpack.c.l.b16 %v83
    %v138 = vunpack.c.h.b16 %v83
    %v139 = vunpack.c.l.b16 %v84
    %v140 = vunpack.c.h.b16 %v84
    %v141 = vunpack.c.l.b16 %v85
    %v142 = vunpack.c.h.b16 %v85
    %v143 = vunpack.c.l.b16 %v86
    %v144 = vunpack.c.h.b16 %v86
    %v145 = vunpack.c.l.b16 %v87
    %v146 = vunpack.c.h.b16 %v87
    %v147 = vunpack.c.l.b16 %v88
    %v148 = vunpack.c.h.b16 %v88
    %v149 = vunpack.c.l.b16 %v89
    %v150 = vunpack.c.h.b16 %v89
    %v151 = vpack.c.b16 %v121, %v119
    %v152 = vpack.c.b16 %v122, %v120
    %v153 = vpack.c.b16 %v125, %v123
    %v154 = vpack.c.b16 %v126, %v124
    %v155 = vpack.c.b16 %v129, %v127
    %v156 = vpack.c.b16 %v130, %v128
    %v157 = vpack.c.b16 %v133, %v131
    %v158 = vpack.c.b16 %v134, %v132
    %v159 = vpack.c.b16 %v137, %v135
    %v160 = vpack.c.b16 %v138, %v136
    %v161 = vpack.c.b16 %v141, %v139
    %v162 = vpack.c.b16 %v142, %v140
    %v163 = vpack.c.b16 %v145, %v143
    %v164 = vpack.c.b16 %v146, %v144
    %v165 = vpack.c.b16 %v149, %v147
    %v166 = vpack.c.b16 %v150, %v148
    %183 = vmatprep.subr.bf16.mxu0 %v152
    %184 = vmatpush1.bf16.msra.mxu0 %v151
    %185 = vmatprep.subr.bf16.mxu0 %v154
    %186 = vmatpush1.bf16.msra.mxu0 %v153
    %187 = vmatprep.subr.bf16.mxu0 %v156
    %188 = vmatpush1.bf16.msra.mxu0 %v155
    %189 = vmatprep.subr.bf16.mxu0 %v158
    %190 = vmatpush1.bf16.msra.mxu0 %v157
    %191 = vmatprep.subr.bf16.mxu0 %v160
    %192 = vmatpush1.bf16.msra.mxu0 %v159
    %193 = vmatprep.subr.bf16.mxu0 %v162
    %194 = vmatpush1.bf16.msra.mxu0 %v161
    %195 = vmatprep.subr.bf16.mxu0 %v164
    %196 = vmatpush1.bf16.msra.mxu0 %v163
    %197 = vmatprep.subr.bf16.mxu0 %v166
    %198 = vmatpush1.bf16.msra.mxu0 %v165
    %199 = vmatprep.subr.bf16.mxu0 0
    %200 = vmatpush1.bf16.msra.mxu0 0
    %201 = vmatprep.subr.bf16.mxu0 0
    %202 = vmatpush1.bf16.msra.mxu0 0
    %203 = vmatprep.subr.bf16.mxu0 0
    %204 = vmatpush1.bf16.msra.mxu0 0
    %205 = vmatprep.subr.bf16.mxu0 0
    %206 = vmatpush1.bf16.msra.mxu0 0
    %207 = vmatprep.subr.bf16.mxu0 0
    %208 = vmatpush1.bf16.msra.mxu0 0
    %209 = vmatprep.subr.bf16.mxu0 0
    %210 = vmatpush1.bf16.msra.mxu0 0
    %211 = vmatprep.subr.bf16.mxu0 0
    %212 = vmatpush1.bf16.msra.mxu0 0
    %213 = vmatprep.subr.bf16.mxu0 0
    %214 = vmatpush1.bf16.msra.mxu0 0
    %215 = vmatprep.mubr.bf16.mxu0 0
    %216 = vmatmul.mubr.bf16.gmra.mrb[0].mxu0 %v91
    %v217 = vpop.f32.mrb[0].mxu0
    %v218 = vadd.f32 %v96, %v217
    %v219 = vpop.f32.mrb[0].mxu0
    %v220 = vadd.f32 %v100, %v219
    %v221 = vpop.f32.mrb[0].mxu0
    %v222 = vpop.f32.mrb[0].mxu0
    %223 = vdwg.mxu0
    %v224 = vmax.f32 %v218, 0.0
    %v225 = vmax.f32 %v220, 0.0
    %v226 = vld [vmem:[#allocation7] sm:$0xf]
    %v227 = vld [vmem:[#allocation7 + $0x4] sm:$0xf]
    %v228 = vld [vmem:[#allocation7 + $0x8] sm:$0xf]
    %v229 = vld [vmem:[#allocation7 + $0xc] sm:$0xf]
    %v230 = vld [vmem:[#allocation7 + $0x10] sm:$0xf]
    %v231 = vld [vmem:[#allocation7 + $0x14] sm:$0xf]
    %v232 = vld [vmem:[#allocation7 + $0x18] sm:$0xf]
    %v233 = vld [vmem:[#allocation7 + $0x1c] sm:$0xf]
    %v234 = vld [vmem:[#allocation7 + $0x20] sm:$0xf]
    %v235 = vld [vmem:[#allocation7 + $0x24] sm:$0xf]
    %v236 = vld [vmem:[#allocation7 + $0x28] sm:$0xf]
    %v237 = vld [vmem:[#allocation7 + $0x2c] sm:$0xf]
    %v238 = vld [vmem:[#allocation7 + $0x30] sm:$0xf]
    %v239 = vld [vmem:[#allocation7 + $0x34] sm:$0xf]
    %v240 = vld [vmem:[#allocation7 + $0x38] sm:$0xf]
    %v241 = vld [vmem:[#allocation7 + $0x3c] sm:$0xf]
    %v242 = vld [vmem:[#allocation7 + $0x40] sm:$0xf]
    %v243 = vld [vmem:[#allocation7 + $0x44] sm:$0xf]
    %v244 = vld [vmem:[#allocation7 + $0x48] sm:$0xf]
    %v245 = vld [vmem:[#allocation7 + $0x4c] sm:$0xf]
    %v246 = vld [vmem:[#allocation7 + $0x50] sm:$0xf]
    %v247 = vld [vmem:[#allocation7 + $0x54] sm:$0xf]
    %v248 = vld [vmem:[#allocation7 + $0x58] sm:$0xf]
    %v249 = vld [vmem:[#allocation7 + $0x5c] sm:$0xf]
    %v250 = vld [vmem:[#allocation7 + $0x60] sm:$0xf]
    %v251 = vld [vmem:[#allocation7 + $0x64] sm:$0xf]
    %v252 = vld [vmem:[#allocation7 + $0x68] sm:$0xf]
    %v253 = vld [vmem:[#allocation7 + $0x6c] sm:$0xf]
    %v254 = vld [vmem:[#allocation7 + $0x70] sm:$0xf]
    %v255 = vld [vmem:[#allocation7 + $0x74] sm:$0xf]
    %v256 = vld [vmem:[#allocation7 + $0x78] sm:$0xf]
    %v257 = vld [vmem:[#allocation7 + $0x7c] sm:$0xf]
    %v258 = vld [vmem:[#allocation8 + $0x1] ss:$0 sm:$0xff]
    %v259 = vpack.c.bf16 %v224, %v224
    %v260 = vpack.c.bf16 %v225, %v225
    %v293 = vunpack.c.l.b16 %v226
    %v294 = vunpack.c.l.b16 %v227
    %v295 = vunpack.c.l.b16 %v228
    %v296 = vunpack.c.l.b16 %v229
    %v297 = vunpack.c.l.b16 %v230
    %v298 = vunpack.c.l.b16 %v231
    %v299 = vunpack.c.l.b16 %v232
    %v300 = vunpack.c.l.b16 %v233
    %v301 = vunpack.c.l.b16 %v234
    %v302 = vunpack.c.l.b16 %v235
    %v303 = vunpack.c.l.b16 %v236
    %v304 = vunpack.c.l.b16 %v237
    %v305 = vunpack.c.l.b16 %v238
    %v306 = vunpack.c.l.b16 %v239
    %v307 = vunpack.c.l.b16 %v240
    %v308 = vunpack.c.l.b16 %v241
    %v309 = vunpack.c.l.b16 %v242
    %v310 = vunpack.c.l.b16 %v243
    %v311 = vunpack.c.l.b16 %v244
    %v312 = vunpack.c.l.b16 %v245
    %v313 = vunpack.c.l.b16 %v246
    %v314 = vunpack.c.l.b16 %v247
    %v315 = vunpack.c.l.b16 %v248
    %v316 = vunpack.c.l.b16 %v249
    %v317 = vunpack.c.l.b16 %v250
    %v318 = vunpack.c.l.b16 %v251
    %v319 = vunpack.c.l.b16 %v252
    %v320 = vunpack.c.l.b16 %v253
    %v321 = vunpack.c.l.b16 %v254
    %v322 = vunpack.c.l.b16 %v255
    %v323 = vunpack.c.l.b16 %v256
    %v324 = vunpack.c.l.b16 %v257
    %v325 = vpack.c.b16 %v294, %v293
    %v326 = vpack.c.b16 %v296, %v295
    %v327 = vpack.c.b16 %v298, %v297
    %v328 = vpack.c.b16 %v300, %v299
    %v329 = vpack.c.b16 %v302, %v301
    %v330 = vpack.c.b16 %v304, %v303
    %v331 = vpack.c.b16 %v306, %v305
    %v332 = vpack.c.b16 %v308, %v307
    %v333 = vpack.c.b16 %v310, %v309
    %v334 = vpack.c.b16 %v312, %v311
    %v335 = vpack.c.b16 %v314, %v313
    %v336 = vpack.c.b16 %v316, %v315
    %v337 = vpack.c.b16 %v318, %v317
    %v338 = vpack.c.b16 %v320, %v319
    %v339 = vpack.c.b16 %v322, %v321
    %v340 = vpack.c.b16 %v324, %v323
    %357 = vmatprep.subr.bf16.mxu0 0
    %358 = vmatpush1.bf16.msra.mxu0 %v325
    %359 = vmatprep.subr.bf16.mxu0 0
    %360 = vmatpush1.bf16.msra.mxu0 %v326
    %361 = vmatprep.subr.bf16.mxu0 0
    %362 = vmatpush1.bf16.msra.mxu0 %v327
    %363 = vmatprep.subr.bf16.mxu0 0
    %364 = vmatpush1.bf16.msra.mxu0 %v328
    %365 = vmatprep.subr.bf16.mxu0 0
    %366 = vmatpush1.bf16.msra.mxu0 %v329
    %367 = vmatprep.subr.bf16.mxu0 0
    %368 = vmatpush1.bf16.msra.mxu0 %v330
    %369 = vmatprep.subr.bf16.mxu0 0
    %370 = vmatpush1.bf16.msra.mxu0 %v331
    %371 = vmatprep.subr.bf16.mxu0 0
    %372 = vmatpush1.bf16.msra.mxu0 %v332
    %373 = vmatprep.subr.bf16.mxu0 0
    %374 = vmatpush1.bf16.msra.mxu0 %v333
    %375 = vmatprep.subr.bf16.mxu0 0
    %376 = vmatpush1.bf16.msra.mxu0 %v334
    %377 = vmatprep.subr.bf16.mxu0 0
    %378 = vmatpush1.bf16.msra.mxu0 %v335
    %379 = vmatprep.subr.bf16.mxu0 0
    %380 = vmatpush1.bf16.msra.mxu0 %v336
    %381 = vmatprep.subr.bf16.mxu0 0
    %382 = vmatpush1.bf16.msra.mxu0 %v337
    %383 = vmatprep.subr.bf16.mxu0 0
    %384 = vmatpush1.bf16.msra.mxu0 %v338
    %385 = vmatprep.subr.bf16.mxu0 0
    %386 = vmatpush1.bf16.msra.mxu0 %v339
    %387 = vmatprep.subr.bf16.mxu0 0
    %388 = vmatpush1.bf16.msra.mxu0 %v340
    %389 = vmatprep.mubr.bf16.mxu0 %v260
    %390 = vmatmul.mubr.bf16.gmra.mrb[0].mxu0 %v259
    %v391 = vpop.f32.mrb[0].mxu0
    %v392 = vadd.f32 %v258, %v391
    %v393 = vpop.f32.mrb[0].mxu0
    %v394 = vpop.f32.mrb[0].mxu0
    %v395 = vpop.f32.mrb[0].mxu0
    %396 = vdwg.mxu0
    %v397 = vmax.f32 %v392, 0.0
    %v398 = vld [vmem:[#allocation7 + $0x140] sm:$0xf]
    %v399 = vld [vmem:[#allocation7 + $0x144] sm:$0xf]
    %v400 = vld [vmem:[#allocation7 + $0x148] sm:$0xf]
    %v401 = vld [vmem:[#allocation7 + $0x14c] sm:$0xf]
    %v402 = vld [vmem:[#allocation7 + $0x150] sm:$0xf]
    %v403 = vld [vmem:[#allocation7 + $0x154] sm:$0xf]
    %v404 = vld [vmem:[#allocation7 + $0x158] sm:$0xf]
    %v405 = vld [vmem:[#allocation7 + $0x15c] sm:$0xf]
    %v406 = vld [vmem:[#allocation7 + $0x160] sm:$0xf]
    %v407 = vld [vmem:[#allocation7 + $0x164] sm:$0xf]
    %v408 = vld [vmem:[#allocation7 + $0x168] sm:$0xf]
    %v409 = vld [vmem:[#allocation7 + $0x16c] sm:$0xf]
    %v410 = vld [vmem:[#allocation7 + $0x170] sm:$0xf]
    %v411 = vld [vmem:[#allocation7 + $0x174] sm:$0xf]
    %v412 = vld [vmem:[#allocation7 + $0x178] sm:$0xf]
    %v413 = vld [vmem:[#allocation7 + $0x17c] sm:$0xf]
    %v414 = vld [vmem:[#allocation8 + $0x2] ss:$0 sm:$0xff]
    %v415 = vpack.c.bf16 %v397, %v397
    %v432 = vunpack.c.l.b16 %v398
    %v433 = vunpack.c.l.b16 %v399
    %v434 = vunpack.c.l.b16 %v400
    %v435 = vunpack.c.l.b16 %v401
    %v436 = vunpack.c.l.b16 %v402
    %v437 = vunpack.c.l.b16 %v403
    %v438 = vunpack.c.l.b16 %v404
    %v439 = vunpack.c.l.b16 %v405
    %v440 = vunpack.c.l.b16 %v406
    %v441 = vunpack.c.l.b16 %v407
    %v442 = vunpack.c.l.b16 %v408
    %v443 = vunpack.c.l.b16 %v409
    %v444 = vunpack.c.l.b16 %v410
    %v445 = vunpack.c.l.b16 %v411
    %v446 = vunpack.c.l.b16 %v412
    %v447 = vunpack.c.l.b16 %v413
    %v448 = vpack.c.b16 %v433, %v432
    %v449 = vpack.c.b16 %v435, %v434
    %v450 = vpack.c.b16 %v437, %v436
    %v451 = vpack.c.b16 %v439, %v438
    %v452 = vpack.c.b16 %v441, %v440
    %v453 = vpack.c.b16 %v443, %v442
    %v454 = vpack.c.b16 %v445, %v444
    %v455 = vpack.c.b16 %v447, %v446
    %464 = vmatprep.subr.bf16.mxu0 0
    %465 = vmatpush1.bf16.msra.mxu0 %v448
    %466 = vmatprep.subr.bf16.mxu0 0
    %467 = vmatpush1.bf16.msra.mxu0 %v449
    %468 = vmatprep.subr.bf16.mxu0 0
    %469 = vmatpush1.bf16.msra.mxu0 %v450
    %470 = vmatprep.subr.bf16.mxu0 0
    %471 = vmatpush1.bf16.msra.mxu0 %v451
    %472 = vmatprep.subr.bf16.mxu0 0
    %473 = vmatpush1.bf16.msra.mxu0 %v452
    %474 = vmatprep.subr.bf16.mxu0 0
    %475 = vmatpush1.bf16.msra.mxu0 %v453
    %476 = vmatprep.subr.bf16.mxu0 0
    %477 = vmatpush1.bf16.msra.mxu0 %v454
    %478 = vmatprep.subr.bf16.mxu0 0
    %479 = vmatpush1.bf16.msra.mxu0 %v455
    %480 = vmatprep.subr.bf16.mxu0 0
    %481 = vmatpush1.bf16.msra.mxu0 0
    %482 = vmatprep.subr.bf16.mxu0 0
    %483 = vmatpush1.bf16.msra.mxu0 0
    %484 = vmatprep.subr.bf16.mxu0 0
    %485 = vmatpush1.bf16.msra.mxu0 0
    %486 = vmatprep.subr.bf16.mxu0 0
    %487 = vmatpush1.bf16.msra.mxu0 0
    %488 = vmatprep.subr.bf16.mxu0 0
    %489 = vmatpush1.bf16.msra.mxu0 0
    %490 = vmatprep.subr.bf16.mxu0 0
    %491 = vmatpush1.bf16.msra.mxu0 0
    %492 = vmatprep.subr.bf16.mxu0 0
    %493 = vmatpush1.bf16.msra.mxu0 0
    %494 = vmatprep.subr.bf16.mxu0 0
    %495 = vmatpush1.bf16.msra.mxu0 0
    %496 = vmatprep.mubr.bf16.mxu0 0
    %497 = vmatmul.mubr.bf16.gmra.mrb[0].mxu0 %v415
    %v498 = vpop.f32.mrb[0].mxu0
    %v499 = vadd.f32 %v414, %v498
    %v500 = vpop.f32.mrb[0].mxu0
    %v501 = vpop.f32.mrb[0].mxu0
    %v502 = vpop.f32.mrb[0].mxu0
    %503 = vdwg.mxu0
    %v504 = vmax.f32 %v499, 0.0
    %v505 = vld [vmem:[#allocation7 + $0x180] sm:$0xf]
    %v506 = vld [vmem:[#allocation7 + $0x184] sm:$0xf]
    %v507 = vld [vmem:[#allocation7 + $0x188] sm:$0xf]
    %v508 = vld [vmem:[#allocation7 + $0x18c] sm:$0xf]
    %v509 = vld [vmem:[#allocation7 + $0x190] sm:$0xf]
    %v510 = vld [vmem:[#allocation7 + $0x194] sm:$0xf]
    %v511 = vld [vmem:[#allocation7 + $0x198] sm:$0xf]
    %v512 = vld [vmem:[#allocation7 + $0x19c] sm:$0xf]
    %v513 = vld [vmem:[#allocation7 + $0x1a0] sm:$0xf]
    %v514 = vld [vmem:[#allocation7 + $0x1a4] sm:$0xf]
    %v515 = vld [vmem:[#allocation7 + $0x1a8] sm:$0xf]
    %v516 = vld [vmem:[#allocation7 + $0x1ac] sm:$0xf]
    %v517 = vld [vmem:[#allocation7 + $0x1b0] sm:$0xf]
    %v518 = vld [vmem:[#allocation7 + $0x1b4] sm:$0xf]
    %v519 = vld [vmem:[#allocation7 + $0x1b8] sm:$0xf]
    %v520 = vld [vmem:[#allocation7 + $0x1bc] sm:$0xf]
    %v521 = vld [vmem:[#allocation8 + $0x3] ss:$0 sm:$0xff]
    %v522 = vpack.c.bf16 %v504, %v504
    %v539 = vunpack.c.l.b16 %v505
    %v540 = vunpack.c.l.b16 %v506
    %v541 = vunpack.c.l.b16 %v507
    %v542 = vunpack.c.l.b16 %v508
    %v543 = vunpack.c.l.b16 %v509
    %v544 = vunpack.c.l.b16 %v510
    %v545 = vunpack.c.l.b16 %v511
    %v546 = vunpack.c.l.b16 %v512
    %v547 = vunpack.c.l.b16 %v513
    %v548 = vunpack.c.l.b16 %v514
    %v549 = vunpack.c.l.b16 %v515
    %v550 = vunpack.c.l.b16 %v516
    %v551 = vunpack.c.l.b16 %v517
    %v552 = vunpack.c.l.b16 %v518
    %v553 = vunpack.c.l.b16 %v519
    %v554 = vunpack.c.l.b16 %v520
    %v555 = vpack.c.b16 %v540, %v539
    %v556 = vpack.c.b16 %v542, %v541
    %v557 = vpack.c.b16 %v544, %v543
    %v558 = vpack.c.b16 %v546, %v545
    %v559 = vpack.c.b16 %v548, %v547
    %v560 = vpack.c.b16 %v550, %v549
    %v561 = vpack.c.b16 %v552, %v551
    %v562 = vpack.c.b16 %v554, %v553
    %571 = vmatprep.subr.bf16.mxu0 0
    %572 = vmatpush1.bf16.msra.mxu0 %v555
    %573 = vmatprep.subr.bf16.mxu0 0
    %574 = vmatpush1.bf16.msra.mxu0 %v556
    %575 = vmatprep.subr.bf16.mxu0 0
    %576 = vmatpush1.bf16.msra.mxu0 %v557
    %577 = vmatprep.subr.bf16.mxu0 0
    %578 = vmatpush1.bf16.msra.mxu0 %v558
    %579 = vmatprep.subr.bf16.mxu0 0
    %580 = vmatpush1.bf16.msra.mxu0 %v559
    %581 = vmatprep.subr.bf16.mxu0 0
    %582 = vmatpush1.bf16.msra.mxu0 %v560
    %583 = vmatprep.subr.bf16.mxu0 0
    %584 = vmatpush1.bf16.msra.mxu0 %v561
    %585 = vmatprep.subr.bf16.mxu0 0
    %586 = vmatpush1.bf16.msra.mxu0 %v562
    %587 = vmatprep.subr.bf16.mxu0 0
    %588 = vmatpush1.bf16.msra.mxu0 0
    %589 = vmatprep.subr.bf16.mxu0 0
    %590 = vmatpush1.bf16.msra.mxu0 0
    %591 = vmatprep.subr.bf16.mxu0 0
    %592 = vmatpush1.bf16.msra.mxu0 0
    %593 = vmatprep.subr.bf16.mxu0 0
    %594 = vmatpush1.bf16.msra.mxu0 0
    %595 = vmatprep.subr.bf16.mxu0 0
    %596 = vmatpush1.bf16.msra.mxu0 0
    %597 = vmatprep.subr.bf16.mxu0 0
    %598 = vmatpush1.bf16.msra.mxu0 0
    %599 = vmatprep.subr.bf16.mxu0 0
    %600 = vmatpush1.bf16.msra.mxu0 0
    %601 = vmatprep.subr.bf16.mxu0 0
    %602 = vmatpush1.bf16.msra.mxu0 0
    %603 = vmatprep.mubr.bf16.mxu0 0
    %604 = vmatmul.mubr.bf16.gmra.mrb[0].mxu0 %v522
    %v605 = vpop.f32.mrb[0].mxu0
    %v606 = vadd.f32 %v521, %v605
    %v607 = vpop.f32.mrb[0].mxu0
    %v608 = vpop.f32.mrb[0].mxu0
    %v609 = vpop.f32.mrb[0].mxu0
    %610 = vdwg.mxu0
    %v611 = vmul.f32 %v606, 0.5
    %v612 = vmul.f32 %v611, 1.442695
    %v613 = vpow.pop %v612
    %615 = vrot.lane.b32.xlu0 %v613, 96
    %v616 = vpop.permute.xlu0 %615
    %v618 = vmul.f32 %v73, %v616
    %v619 = vadd.f32 %v606, %v618
    %v620 = vld [vmem:[#allocation7 + $0x1c0] sm:$0xf]
    %v621 = vld [vmem:[#allocation7 + $0x1c4] sm:$0xf]
    %v622 = vld [vmem:[#allocation7 + $0x1c8] sm:$0xf]
    %v623 = vld [vmem:[#allocation7 + $0x1cc] sm:$0xf]
    %v624 = vld [vmem:[#allocation8 + $0x4] ss:$0 sm:$0xff]
    %v625 = vpack.c.bf16 %v619, %v619
    %v630 = vunpack.c.l.b16 %v620
    %v631 = vunpack.c.l.b16 %v621
    %v632 = vunpack.c.l.b16 %v622
    %v633 = vunpack.c.l.b16 %v623
    %v634 = vpack.c.b16 %v631, %v630
    %v635 = vpack.c.b16 %v633, %v632
    %vm638 = vcmask 261120
    %v640 = vsel %vm638, %v625, 0
    %642 = vmatprep.subr.bf16.mxu0 0
    %643 = vmatpush1.bf16.msra.mxu0 %v634
    %644 = vmatprep.subr.bf16.mxu0 0
    %645 = vmatpush1.bf16.msra.mxu0 %v635
    %646 = vmatprep.subr.bf16.mxu0 0
    %647 = vmatpush1.bf16.msra.mxu0 0
    %648 = vmatprep.subr.bf16.mxu0 0
    %649 = vmatpush1.bf16.msra.mxu0 0
    %650 = vmatprep.subr.bf16.mxu0 0
    %651 = vmatpush1.bf16.msra.mxu0 0
    %652 = vmatprep.subr.bf16.mxu0 0
    %653 = vmatpush1.bf16.msra.mxu0 0
    %654 = vmatprep.subr.bf16.mxu0 0
    %655 = vmatpush1.bf16.msra.mxu0 0
    %656 = vmatprep.subr.bf16.mxu0 0
    %657 = vmatpush1.bf16.msra.mxu0 0
    %658 = vmatprep.subr.bf16.mxu0 0
    %659 = vmatpush1.bf16.msra.mxu0 0
    %660 = vmatprep.subr.bf16.mxu0 0
    %661 = vmatpush1.bf16.msra.mxu0 0
    %662 = vmatprep.subr.bf16.mxu0 0
    %663 = vmatpush1.bf16.msra.mxu0 0
    %664 = vmatprep.subr.bf16.mxu0 0
    %665 = vmatpush1.bf16.msra.mxu0 0
    %666 = vmatprep.subr.bf16.mxu0 0
    %667 = vmatpush1.bf16.msra.mxu0 0
    %668 = vmatprep.subr.bf16.mxu0 0
    %669 = vmatpush1.bf16.msra.mxu0 0
    %670 = vmatprep.subr.bf16.mxu0 0
    %671 = vmatpush1.bf16.msra.mxu0 0
    %672 = vmatprep.subr.bf16.mxu0 0
    %673 = vmatpush1.bf16.msra.mxu0 0
    %674 = vmatprep.mubr.bf16.mxu0 0
    %675 = vmatmul.mubr.bf16.gmra.mrb[0].mxu0 %v640
    %v676 = vpop.f32.mrb[0].mxu0
    %v677 = vadd.f32 %v624, %v676
    %v678 = vpop.f32.mrb[0].mxu0
    %v679 = vpop.f32.mrb[0].mxu0
    %v680 = vpop.f32.mrb[0].mxu0
    %681 = vdwg.mxu0
    %v682 = vmax.f32 %v677, 0.0
    %v683 = vld [vmem:[#allocation7 + $0x80] sm:$0xf]
    %v684 = vld [vmem:[#allocation7 + $0x84] sm:$0xf]
    %v685 = vld [vmem:[#allocation7 + $0x88] sm:$0xf]
    %v686 = vld [vmem:[#allocation7 + $0x8c] sm:$0xf]
    %v687 = vld [vmem:[#allocation7 + $0x90] sm:$0xf]
    %v688 = vld [vmem:[#allocation7 + $0x94] sm:$0xf]
    %v689 = vld [vmem:[#allocation7 + $0x98] sm:$0xf]
    %v690 = vld [vmem:[#allocation7 + $0x9c] sm:$0xf]
    %v691 = vld [vmem:[#allocation7 + $0xa0] sm:$0xf]
    %v692 = vld [vmem:[#allocation7 + $0xa4] sm:$0xf]
    %v693 = vld [vmem:[#allocation7 + $0xa8] sm:$0xf]
    %v694 = vld [vmem:[#allocation7 + $0xac] sm:$0xf]
    %v695 = vld [vmem:[#allocation7 + $0xb0] sm:$0xf]
    %v696 = vld [vmem:[#allocation7 + $0xb4] sm:$0xf]
    %v697 = vld [vmem:[#allocation7 + $0xb8] sm:$0xf]
    %v698 = vld [vmem:[#allocation7 + $0xbc] sm:$0xf]
    %v699 = vld [vmem:[#allocation8 + $0x5] ss:$0 sm:$0xff]
    %v700 = vpack.c.bf16 %v682, %v682
    %v717 = vunpack.c.l.b16 %v683
    %v718 = vunpack.c.l.b16 %v684
    %v719 = vunpack.c.l.b16 %v685
    %v720 = vunpack.c.l.b16 %v686
    %v721 = vunpack.c.l.b16 %v687
    %v722 = vunpack.c.l.b16 %v688
    %v723 = vunpack.c.l.b16 %v689
    %v724 = vunpack.c.l.b16 %v690
    %v725 = vunpack.c.l.b16 %v691
    %v726 = vunpack.c.l.b16 %v692
    %v727 = vunpack.c.l.b16 %v693
    %v728 = vunpack.c.l.b16 %v694
    %v729 = vunpack.c.l.b16 %v695
    %v730 = vunpack.c.l.b16 %v696
    %v731 = vunpack.c.l.b16 %v697
    %v732 = vunpack.c.l.b16 %v698
    %v733 = vpack.c.b16 %v718, %v717
    %v734 = vpack.c.b16 %v720, %v719
    %v735 = vpack.c.b16 %v722, %v721
    %v736 = vpack.c.b16 %v724, %v723
    %v737 = vpack.c.b16 %v726, %v725
    %v738 = vpack.c.b16 %v728, %v727
    %v739 = vpack.c.b16 %v730, %v729
    %v740 = vpack.c.b16 %v732, %v731
    %749 = vmatprep.subr.bf16.mxu0 0
    %750 = vmatpush1.bf16.msra.mxu0 %v733
    %751 = vmatprep.subr.bf16.mxu0 0
    %752 = vmatpush1.bf16.msra.mxu0 %v734
    %753 = vmatprep.subr.bf16.mxu0 0
    %754 = vmatpush1.bf16.msra.mxu0 %v735
    %755 = vmatprep.subr.bf16.mxu0 0
    %756 = vmatpush1.bf16.msra.mxu0 %v736
    %757 = vmatprep.subr.bf16.mxu0 0
    %758 = vmatpush1.bf16.msra.mxu0 %v737
    %759 = vmatprep.subr.bf16.mxu0 0
    %760 = vmatpush1.bf16.msra.mxu0 %v738
    %761 = vmatprep.subr.bf16.mxu0 0
    %762 = vmatpush1.bf16.msra.mxu0 %v739
    %763 = vmatprep.subr.bf16.mxu0 0
    %764 = vmatpush1.bf16.msra.mxu0 %v740
    %765 = vmatprep.subr.bf16.mxu0 0
    %766 = vmatpush1.bf16.msra.mxu0 0
    %767 = vmatprep.subr.bf16.mxu0 0
    %768 = vmatpush1.bf16.msra.mxu0 0
    %769 = vmatprep.subr.bf16.mxu0 0
    %770 = vmatpush1.bf16.msra.mxu0 0
    %771 = vmatprep.subr.bf16.mxu0 0
    %772 = vmatpush1.bf16.msra.mxu0 0
    %773 = vmatprep.subr.bf16.mxu0 0
    %774 = vmatpush1.bf16.msra.mxu0 0
    %775 = vmatprep.subr.bf16.mxu0 0
    %776 = vmatpush1.bf16.msra.mxu0 0
    %777 = vmatprep.subr.bf16.mxu0 0
    %778 = vmatpush1.bf16.msra.mxu0 0
    %779 = vmatprep.subr.bf16.mxu0 0
    %780 = vmatpush1.bf16.msra.mxu0 0
    %781 = vmatprep.mubr.bf16.mxu0 0
    %782 = vmatmul.mubr.bf16.gmra.mrb[0].mxu0 %v700
    %v783 = vpop.f32.mrb[0].mxu0
    %v784 = vadd.f32 %v699, %v783
    %v785 = vpop.f32.mrb[0].mxu0
    %v786 = vpop.f32.mrb[0].mxu0
    %v787 = vpop.f32.mrb[0].mxu0
    %788 = vdwg.mxu0
    %v789 = vmax.f32 %v784, 0.0
    %v790 = vld [vmem:[#allocation5 + $0x80] sm:$0xff]
    %v791 = vld [vmem:[#allocation5 + $0x88] sm:$0xff]
    %v792 = vld [vmem:[#allocation5 + $0x90] sm:$0xff]
    %v793 = vld [vmem:[#allocation5 + $0x98] sm:$0xff]
    %v794 = vld [vmem:[#allocation5 + $0xa0] sm:$0xff]
    %v795 = vld [vmem:[#allocation5 + $0xa8] sm:$0xff]
    %v796 = vld [vmem:[#allocation5 + $0xb0] sm:$0xff]
    %v797 = vld [vmem:[#allocation5 + $0xb8] sm:$0xff]
    %v798 = vld [vmem:[#allocation5 + $0xc0] sm:$0xff]
    %v799 = vld [vmem:[#allocation5 + $0xc8] sm:$0xff]
    %v800 = vld [vmem:[#allocation5 + $0xd0] sm:$0xff]
    %v801 = vld [vmem:[#allocation5 + $0xd8] sm:$0xff]
    %v802 = vld [vmem:[#allocation5 + $0xe0] sm:$0xff]
    %v803 = vld [vmem:[#allocation5 + $0xe8] sm:$0xff]
    %v804 = vld [vmem:[#allocation5 + $0xf0] sm:$0xff]
    %v805 = vld [vmem:[#allocation5 + $0xf8] sm:$0xff]
    %s806 = scalar_lea.vmem [#allocation8], 6
    %v807 = vld [vmem:[%s806] ss:$8 sm:$0x3]
    %v808 = vpack.c.bf16 %v789, %v789
    %v810 = vlaneseq
    %v811 = vshrl.u32 %v810, 7
    %v812 = vsub.s32 0, %v811
    %v813 = vrot.slane %v807, %v812
    %v814 = vlaneseq
    %v815 = vshrl.u32 %v814, 7
    %v816 = vsub.s32 1, %v815
    %v817 = vrot.slane %v807, %v816
    %v836 = vunpack.c.l.b16 %v790
    %v837 = vunpack.c.h.b16 %v790
    %v838 = vunpack.c.l.b16 %v791
    %v839 = vunpack.c.h.b16 %v791
    %v840 = vunpack.c.l.b16 %v792
    %v841 = vunpack.c.h.b16 %v792
    %v842 = vunpack.c.l.b16 %v793
    %v843 = vunpack.c.h.b16 %v793
    %v844 = vunpack.c.l.b16 %v794
    %v845 = vunpack.c.h.b16 %v794
    %v846 = vunpack.c.l.b16 %v795
    %v847 = vunpack.c.h.b16 %v795
    %v848 = vunpack.c.l.b16 %v796
    %v849 = vunpack.c.h.b16 %v796
    %v850 = vunpack.c.l.b16 %v797
    %v851 = vunpack.c.h.b16 %v797
    %v852 = vunpack.c.l.b16 %v798
    %v853 = vunpack.c.h.b16 %v798
    %v854 = vunpack.c.l.b16 %v799
    %v855 = vunpack.c.h.b16 %v799
    %v856 = vunpack.c.l.b16 %v800
    %v857 = vunpack.c.h.b16 %v800
    %v858 = vunpack.c.l.b16 %v801
    %v859 = vunpack.c.h.b16 %v801
    %v860 = vunpack.c.l.b16 %v802
    %v861 = vunpack.c.h.b16 %v802
    %v862 = vunpack.c.l.b16 %v803
    %v863 = vunpack.c.h.b16 %v803
    %v864 = vunpack.c.l.b16 %v804
    %v865 = vunpack.c.h.b16 %v804
    %v866 = vunpack.c.l.b16 %v805
    %v867 = vunpack.c.h.b16 %v805
    %v868 = vpack.c.b16 %v838, %v836
    %v869 = vpack.c.b16 %v839, %v837
    %v870 = vpack.c.b16 %v842, %v840
    %v871 = vpack.c.b16 %v843, %v841
    %v872 = vpack.c.b16 %v846, %v844
    %v873 = vpack.c.b16 %v847, %v845
    %v874 = vpack.c.b16 %v850, %v848
    %v875 = vpack.c.b16 %v851, %v849
    %v876 = vpack.c.b16 %v854, %v852
    %v877 = vpack.c.b16 %v855, %v853
    %v878 = vpack.c.b16 %v858, %v856
    %v879 = vpack.c.b16 %v859, %v857
    %v880 = vpack.c.b16 %v862, %v860
    %v881 = vpack.c.b16 %v863, %v861
    %v882 = vpack.c.b16 %v866, %v864
    %v883 = vpack.c.b16 %v867, %v865
    %900 = vmatprep.subr.bf16.mxu0 %v869
    %901 = vmatpush1.bf16.msra.mxu0 %v868
    %902 = vmatprep.subr.bf16.mxu0 %v871
    %903 = vmatpush1.bf16.msra.mxu0 %v870
    %904 = vmatprep.subr.bf16.mxu0 %v873
    %905 = vmatpush1.bf16.msra.mxu0 %v872
    %906 = vmatprep.subr.bf16.mxu0 %v875
    %907 = vmatpush1.bf16.msra.mxu0 %v874
    %908 = vmatprep.subr.bf16.mxu0 %v877
    %909 = vmatpush1.bf16.msra.mxu0 %v876
    %910 = vmatprep.subr.bf16.mxu0 %v879
    %911 = vmatpush1.bf16.msra.mxu0 %v878
    %912 = vmatprep.subr.bf16.mxu0 %v881
    %913 = vmatpush1.bf16.msra.mxu0 %v880
    %914 = vmatprep.subr.bf16.mxu0 %v883
    %915 = vmatpush1.bf16.msra.mxu0 %v882
    %916 = vmatprep.subr.bf16.mxu0 0
    %917 = vmatpush1.bf16.msra.mxu0 0
    %918 = vmatprep.subr.bf16.mxu0 0
    %919 = vmatpush1.bf16.msra.mxu0 0
    %920 = vmatprep.subr.bf16.mxu0 0
    %921 = vmatpush1.bf16.msra.mxu0 0
    %922 = vmatprep.subr.bf16.mxu0 0
    %923 = vmatpush1.bf16.msra.mxu0 0
    %924 = vmatprep.subr.bf16.mxu0 0
    %925 = vmatpush1.bf16.msra.mxu0 0
    %926 = vmatprep.subr.bf16.mxu0 0
    %927 = vmatpush1.bf16.msra.mxu0 0
    %928 = vmatprep.subr.bf16.mxu0 0
    %929 = vmatpush1.bf16.msra.mxu0 0
    %930 = vmatprep.subr.bf16.mxu0 0
    %931 = vmatpush1.bf16.msra.mxu0 0
    %932 = vmatprep.mubr.bf16.mxu0 0
    %933 = vmatmul.mubr.bf16.gmra.mrb[0].mxu0 %v808
    %v934 = vpop.f32.mrb[0].mxu0
    %v935 = vadd.f32 %v813, %v934
    %v936 = vpop.f32.mrb[0].mxu0
    %v937 = vadd.f32 %v817, %v936
    %v938 = vpop.f32.mrb[0].mxu0
    %v939 = vpop.f32.mrb[0].mxu0
    %940 = vdwg.mxu0
    %v941 = vmax.f32 %v935, 0.0
    %v942 = vmax.f32 %v937, 0.0
    %v943 = vld [vmem:[#allocation7 + $0xc0] sm:$0xf]
    %v944 = vld [vmem:[#allocation7 + $0xc4] sm:$0xf]
    %v945 = vld [vmem:[#allocation7 + $0xc8] sm:$0xf]
    %v946 = vld [vmem:[#allocation7 + $0xcc] sm:$0xf]
    %v947 = vld [vmem:[#allocation7 + $0xd0] sm:$0xf]
    %v948 = vld [vmem:[#allocation7 + $0xd4] sm:$0xf]
    %v949 = vld [vmem:[#allocation7 + $0xd8] sm:$0xf]
    %v950 = vld [vmem:[#allocation7 + $0xdc] sm:$0xf]
    %v951 = vld [vmem:[#allocation7 + $0xe0] sm:$0xf]
    %v952 = vld [vmem:[#allocation7 + $0xe4] sm:$0xf]
    %v953 = vld [vmem:[#allocation7 + $0xe8] sm:$0xf]
    %v954 = vld [vmem:[#allocation7 + $0xec] sm:$0xf]
    %v955 = vld [vmem:[#allocation7 + $0xf0] sm:$0xf]
    %v956 = vld [vmem:[#allocation7 + $0xf4] sm:$0xf]
    %v957 = vld [vmem:[#allocation7 + $0xf8] sm:$0xf]
    %v958 = vld [vmem:[#allocation7 + $0xfc] sm:$0xf]
    %v959 = vld [vmem:[#allocation7 + $0x100] sm:$0xf]
    %v960 = vld [vmem:[#allocation7 + $0x104] sm:$0xf]
    %v961 = vld [vmem:[#allocation7 + $0x108] sm:$0xf]
    %v962 = vld [vmem:[#allocation7 + $0x10c] sm:$0xf]
    %v963 = vld [vmem:[#allocation7 + $0x110] sm:$0xf]
    %v964 = vld [vmem:[#allocation7 + $0x114] sm:$0xf]
    %v965 = vld [vmem:[#allocation7 + $0x118] sm:$0xf]
    %v966 = vld [vmem:[#allocation7 + $0x11c] sm:$0xf]
    %v967 = vld [vmem:[#allocation7 + $0x120] sm:$0xf]
    %v968 = vld [vmem:[#allocation7 + $0x124] sm:$0xf]
    %v969 = vld [vmem:[#allocation7 + $0x128] sm:$0xf]
    %v970 = vld [vmem:[#allocation7 + $0x12c] sm:$0xf]
    %v971 = vld [vmem:[#allocation7 + $0x130] sm:$0xf]
    %v972 = vld [vmem:[#allocation7 + $0x134] sm:$0xf]
    %v973 = vld [vmem:[#allocation7 + $0x138] sm:$0xf]
    %v974 = vld [vmem:[#allocation7 + $0x13c] sm:$0xf]
    %v975 = vld [vmem:[#allocation8 + $0x7] ss:$0 sm:$0xff]
    %v976 = vpack.c.bf16 %v941, %v941
    %v977 = vpack.c.bf16 %v942, %v942
    %v1010 = vunpack.c.l.b16 %v943
    %v1011 = vunpack.c.l.b16 %v944
    %v1012 = vunpack.c.l.b16 %v945
    %v1013 = vunpack.c.l.b16 %v946
    %v1014 = vunpack.c.l.b16 %v947
    %v1015 = vunpack.c.l.b16 %v948
    %v1016 = vunpack.c.l.b16 %v949
    %v1017 = vunpack.c.l.b16 %v950
    %v1018 = vunpack.c.l.b16 %v951
    %v1019 = vunpack.c.l.b16 %v952
    %v1020 = vunpack.c.l.b16 %v953
    %v1021 = vunpack.c.l.b16 %v954
    %v1022 = vunpack.c.l.b16 %v955
    %v1023 = vunpack.c.l.b16 %v956
    %v1024 = vunpack.c.l.b16 %v957
    %v1025 = vunpack.c.l.b16 %v958
    %v1026 = vunpack.c.l.b16 %v959
    %v1027 = vunpack.c.l.b16 %v960
    %v1028 = vunpack.c.l.b16 %v961
    %v1029 = vunpack.c.l.b16 %v962
    %v1030 = vunpack.c.l.b16 %v963
    %v1031 = vunpack.c.l.b16 %v964
    %v1032 = vunpack.c.l.b16 %v965
    %v1033 = vunpack.c.l.b16 %v966
    %v1034 = vunpack.c.l.b16 %v967
    %v1035 = vunpack.c.l.b16 %v968
    %v1036 = vunpack.c.l.b16 %v969
    %v1037 = vunpack.c.l.b16 %v970
    %v1038 = vunpack.c.l.b16 %v971
    %v1039 = vunpack.c.l.b16 %v972
    %v1040 = vunpack.c.l.b16 %v973
    %v1041 = vunpack.c.l.b16 %v974
    %v1042 = vpack.c.b16 %v1011, %v1010
    %v1043 = vpack.c.b16 %v1013, %v1012
    %v1044 = vpack.c.b16 %v1015, %v1014
    %v1045 = vpack.c.b16 %v1017, %v1016
    %v1046 = vpack.c.b16 %v1019, %v1018
    %v1047 = vpack.c.b16 %v1021, %v1020
    %v1048 = vpack.c.b16 %v1023, %v1022
    %v1049 = vpack.c.b16 %v1025, %v1024
    %v1050 = vpack.c.b16 %v1027, %v1026
    %v1051 = vpack.c.b16 %v1029, %v1028
    %v1052 = vpack.c.b16 %v1031, %v1030
    %v1053 = vpack.c.b16 %v1033, %v1032
    %v1054 = vpack.c.b16 %v1035, %v1034
    %v1055 = vpack.c.b16 %v1037, %v1036
    %v1056 = vpack.c.b16 %v1039, %v1038
    %v1057 = vpack.c.b16 %v1041, %v1040
    %1074 = vmatprep.subr.bf16.mxu0 0
    %1075 = vmatpush1.bf16.msra.mxu0 %v1042
    %1076 = vmatprep.subr.bf16.mxu0 0
    %1077 = vmatpush1.bf16.msra.mxu0 %v1043
    %1078 = vmatprep.subr.bf16.mxu0 0
    %1079 = vmatpush1.bf16.msra.mxu0 %v1044
    %1080 = vmatprep.subr.bf16.mxu0 0
    %1081 = vmatpush1.bf16.msra.mxu0 %v1045
    %1082 = vmatprep.subr.bf16.mxu0 0
    %1083 = vmatpush1.bf16.msra.mxu0 %v1046
    %1084 = vmatprep.subr.bf16.mxu0 0
    %1085 = vmatpush1.bf16.msra.mxu0 %v1047
    %1086 = vmatprep.subr.bf16.mxu0 0
    %1087 = vmatpush1.bf16.msra.mxu0 %v1048
    %1088 = vmatprep.subr.bf16.mxu0 0
    %1089 = vmatpush1.bf16.msra.mxu0 %v1049
    %1090 = vmatprep.subr.bf16.mxu0 0
    %1091 = vmatpush1.bf16.msra.mxu0 %v1050
    %1092 = vmatprep.subr.bf16.mxu0 0
    %1093 = vmatpush1.bf16.msra.mxu0 %v1051
    %1094 = vmatprep.subr.bf16.mxu0 0
    %1095 = vmatpush1.bf16.msra.mxu0 %v1052
    %1096 = vmatprep.subr.bf16.mxu0 0
    %1097 = vmatpush1.bf16.msra.mxu0 %v1053
    %1098 = vmatprep.subr.bf16.mxu0 0
    %1099 = vmatpush1.bf16.msra.mxu0 %v1054
    %1100 = vmatprep.subr.bf16.mxu0 0
    %1101 = vmatpush1.bf16.msra.mxu0 %v1055
    %1102 = vmatprep.subr.bf16.mxu0 0
    %1103 = vmatpush1.bf16.msra.mxu0 %v1056
    %1104 = vmatprep.subr.bf16.mxu0 0
    %1105 = vmatpush1.bf16.msra.mxu0 %v1057
    %1106 = vmatprep.mubr.bf16.mxu0 %v977
    %1107 = vmatmul.mubr.bf16.gmra.mrb[0].mxu0 %v976
    %v1108 = vpop.f32.mrb[0].mxu0
    %v1109 = vadd.f32 %v975, %v1108
    %v1110 = vpop.f32.mrb[0].mxu0
    %v1111 = vpop.f32.mrb[0].mxu0
    %v1112 = vpop.f32.mrb[0].mxu0
    %1113 = vdwg.mxu0
    %1114 = vst [vmem:[#allocation10] sm:$0xff] %v1109
    %1115 = vst [vmem:[#allocation10 + $0x8] sm:$0xff] %v606
    // Predicated region
    $region34: #{tpu_custom_call.1} parent=1 // pred_check
      _
    $region35: #{tpu_custom_call.1} parent=1 // pred_check_branch
      %1117 = sbr.rel (0) target = $region37
    $region36: #{tpu_custom_call.1} parent=1 // pred_region
      %s1119 = ssub.s32 256, 256
      %1120 = vsyncadd [#allocation4], %s1119
      %s1121 = sshll.u32 [#allocation10], 4
      %s1122 = int_to_ptr.vmem [resolvable:$true] %s1121
      %1127 = dma.vmem_to_hbm [thread:$0]  %s1122, 256, %s4, [#allocation4], 128, 128, 8
    $region37: #{tpu_custom_call.1} parent=1 // pred_fallthru
      _
    // Predicated region
    $region38: #{tpu_custom_call.1} parent=1 // pred_check
      _
    $region39: #{tpu_custom_call.1} parent=1 // pred_check_branch
      %1129 = sbr.rel (0) target = $region41
    $region40: #{tpu_custom_call.1} parent=1 // pred_region
      %1130 = dma.done [#allocation4], 256
    $region41: #{tpu_custom_call.1} parent=1 // pred_fallthru
      _
    %1131 = vsyncpa [#allocation3], 1
    %1132 = vsyncpa [#allocation6], 1
    %1133 = vsyncpa [#allocation9], 1
    %1134 = vsyncpa [#allocation4], 1

</llo_original>
